<compile_context>
chip_gen: v7x
topology: tpu7x:2x2x1
jax: 0.10.0
libtpu: 0.0.40
codegen_flags: <defaults>
</compile_context>

<pallas_src>
import jax
import jax.numpy as jnp
from jax.experimental import pallas as pl
from jax.experimental.pallas import tpu as pltpu


def _scse_kernel(x_ref, cs_ref, ws_ref, bs_ref, o_ref):
    # x_ref : (1, C, HW_t)  one batch element, one spatial tile
    # cs_ref: (1, C, 1)     precomputed cSE gate (already sigmoided)
    # ws_ref: (C, 1)        sSE 1x1-conv weight
    # bs_ref: (1,) in SMEM  sSE 1x1-conv bias (scalar)
    x = x_ref[0]                                              # (C, HW_t)
    ws = ws_ref[...]                                          # (C, 1)

    # sSE branch: per-pixel channel reduction on VPU + XLU (no MXU, no masked N=1 stores).
    s = jnp.sum(x * ws, axis=0, keepdims=True) + bs_ref[0]    # (1, HW_t)
    sscale = jax.nn.sigmoid(s)

    cscale = cs_ref[0]                                        # (C, 1)

    # x*cSE(x) + x*sSE(x) == x * (cSE(x) + sSE(x))
    o_ref[0] = x * (cscale + sscale)


def _pick_block_hw(hw, c, target_bytes=2 << 20):
    """Largest spatial tile that is a multiple of 128, divides HW, ~<= target_bytes."""
    if hw % 128 != 0:
        return hw                       # full extent is always a legal block
    cap = max(128, (target_bytes // (4 * c)) // 128 * 128)
    if hw <= cap:
        return hw
    for t in range(cap, 127, -128):
        if hw % t == 0:
            return t
    return hw


def scse_attention(x_nchw, params):
    """SEAttention(name='scse') forward. x_nchw: (B, C, H, W) float32."""
    w1, b1, w2, b2, ws, bs = params
    B, C, H, W = x_nchw.shape
    HW = H * W

    # Free relayout: NCHW is already (B, C, HW)-major. No transposes.
    x = x_nchw.reshape(B, C, HW)

    # ---- cSE gate hoisted out of the kernel: one tiny batched MLP in JAX ----
    mean = jnp.mean(x, axis=2)                                  # (B, C)
    h = mean @ w1 + b1                                          # (B, Cr)
    h = jnp.where(h > 0, h, 0.01 * h)                           # LeakyReLU(0.01)
    cscale = jax.nn.sigmoid(h @ w2 + b2)                        # (B, C)
    cscale = cscale.reshape(B, C, 1).astype(jnp.float32)

    ws = ws.astype(jnp.float32)                                 # (C, 1)
    bs_flat = bs.reshape(1).astype(jnp.float32)                 # scalar -> SMEM

    block_hw = _pick_block_hw(HW, C)
    grid = (B, HW // block_hw)

    out = pl.pallas_call(
        _scse_kernel,
        out_shape=jax.ShapeDtypeStruct((B, C, HW), jnp.float32),
        grid_spec=pltpu.PrefetchScalarGridSpec(
            num_scalar_prefetch=0,
            grid=grid,
            in_specs=[
                pl.BlockSpec((1, C, block_hw), lambda b, j: (b, 0, j)),   # x
                pl.BlockSpec((1, C, 1), lambda b, j: (b, 0, 0)),          # cscale
                pl.BlockSpec((C, 1), lambda b, j: (0, 0)),                # ws
                pl.BlockSpec(memory_space=pltpu.MemorySpace.SMEM),        # bs
            ],
            out_specs=pl.BlockSpec((1, C, block_hw), lambda b, j: (b, 0, j)),
        ),
        compiler_params=pltpu.CompilerParams(
            dimension_semantics=("parallel", "parallel")),
    )(x, cscale, ws, bs_flat)

    return out.reshape(B, C, H, W)


def init_params(key, in_channels, reduction=16):
    """Deterministic synthetic parameters matching SCSEModule's layer shapes."""
    Cr = in_channels // reduction
    k = jax.random.split(key, 6)
    # Conv2d(C, Cr, 1): weight (Cr, C, 1, 1) -> stored as (C, Cr) for x @ W.
    w1 = 0.1 * jax.random.normal(k[0], (in_channels, Cr), jnp.float32)
    b1 = 0.1 * jax.random.normal(k[1], (1, Cr), jnp.float32)
    # Conv2d(Cr, C, 1)
    w2 = 0.1 * jax.random.normal(k[2], (Cr, in_channels), jnp.float32)
    b2 = 0.1 * jax.random.normal(k[3], (1, in_channels), jnp.float32)
    # Conv2d(C, 1, 1)
    ws = 0.1 * jax.random.normal(k[4], (in_channels, 1), jnp.float32)
    bs = 0.1 * jax.random.normal(k[5], (1, 1), jnp.float32)
    return (w1, b1, w2, b2, ws, bs)


def scse_reference(x_nchw, params):
    """Pure-JAX reference of SCSEModule.forward for verification (NCHW)."""
    w1, b1, w2, b2, ws, bs = params
    mean = jnp.mean(x_nchw, axis=(2, 3))                         # (B, C)
    h = mean @ w1 + b1
    h = jnp.where(h > 0, h, 0.01 * h)
    cscale = jax.nn.sigmoid(h @ w2 + b2)                         # (B, C)
    s = jnp.einsum('bchw,co->bohw', x_nchw, ws) + bs[0, 0]       # (B, 1, H, W)
    sscale = jax.nn.sigmoid(s)
    return x_nchw * cscale[:, :, None, None] + x_nchw * sscale


if __name__ == "__main__":
    B, C, H, W = 2, 32, 16, 16       # reduction=16 -> hidden = 2; HW = 256 (lane-dense)
    key = jax.random.PRNGKey(0)
    kx, kp = jax.random.split(key)
    x = jax.random.normal(kx, (B, C, H, W), jnp.float32)
    params = init_params(kp, C, reduction=16)

    out = jax.block_until_ready(scse_attention(x, params))

    ref = scse_reference(x, params)
    assert out.shape == (B, C, H, W)
    assert jnp.allclose(out, ref, atol=1e-5, rtol=1e-5), "mismatch vs reference"
    print("KERNEL_OK")
</pallas_src>

<mosaic_0001>
module attributes {stable_mosaic.version = 11 : i64} {
  func.func @_scse_kernel(%arg0: i32, %arg1: i32, %arg2: memref<1x32x256xf32, #tpu.memory_space<vmem>>, %arg3: memref<1x32x1xf32, #tpu.memory_space<vmem>>, %arg4: memref<32x1xf32, #tpu.memory_space<vmem>>, %arg5: memref<1xf32, #tpu.memory_space<smem>>, %arg6: memref<1x32x256xf32, #tpu.memory_space<vmem>>) attributes {dimension_semantics = [#tpu.dimension_semantics<parallel>, #tpu.dimension_semantics<parallel>], iteration_bounds = array<i64: 2, 1>, scalar_prefetch = 0 : i64, scratch_operands = 0 : i64, tpu.core_type = #tpu.core_type<tc>, window_params = [{transform_indices = @transform_0, window_bounds = array<i64: 1, 32, 256>}, {transform_indices = @transform_1, window_bounds = array<i64: 1, 32, 1>}, {pipeline_mode = #tpu.pipeline_mode<synchronous>, transform_indices = @transform_2, window_bounds = array<i64: 32, 1>}, {transform_indices = @transform_3, window_bounds = array<i64: 1>}, {transform_indices = @transform_4, window_bounds = array<i64: 1, 32, 256>}]} {
    %c0 = arith.constant 0 : index
    %c0_0 = arith.constant 0 : index
    %c0_1 = arith.constant 0 : index
    %0 = vector.load %arg2[%c0, %c0_0, %c0_1] : memref<1x32x256xf32, #tpu.memory_space<vmem>>, vector<1x32x256xf32>
    %1 = vector.shape_cast %0 : vector<1x32x256xf32> to vector<32x256xf32>
    %c0_2 = arith.constant 0 : index
    %c0_3 = arith.constant 0 : index
    %2 = vector.load %arg4[%c0_2, %c0_3] : memref<32x1xf32, #tpu.memory_space<vmem>>, vector<32x1xf32>
    %3 = vector.broadcast %2 : vector<32x1xf32> to vector<32x256xf32>
    %4 = arith.mulf %1, %3 : vector<32x256xf32>
    %cst = arith.constant dense<0.000000e+00> : vector<256xf32>
    %5 = vector.multi_reduction <add>, %4, %cst [0] : vector<32x256xf32> to vector<256xf32>
    %6 = vector.shape_cast %5 : vector<256xf32> to vector<1x256xf32>
    %c0_4 = arith.constant 0 : index
    %7 = memref.load %arg5[%c0_4] : memref<1xf32, #tpu.memory_space<smem>>
    %8 = vector.broadcast %7 : f32 to vector<1x256xf32>
    %9 = arith.addf %6, %8 : vector<1x256xf32>
    %10 = arith.negf %9 : vector<1x256xf32>
    %11 = math.exp %10 : vector<1x256xf32>
    %cst_5 = arith.constant 1.000000e+00 : f32
    %12 = vector.broadcast %cst_5 : f32 to vector<1x256xf32>
    %13 = arith.addf %12, %11 : vector<1x256xf32>
    %14 = arith.divf %12, %13 : vector<1x256xf32>
    %c0_6 = arith.constant 0 : index
    %c0_7 = arith.constant 0 : index
    %c0_8 = arith.constant 0 : index
    %15 = vector.load %arg3[%c0_6, %c0_7, %c0_8] : memref<1x32x1xf32, #tpu.memory_space<vmem>>, vector<1x32x1xf32>
    %16 = vector.shape_cast %15 : vector<1x32x1xf32> to vector<32x1xf32>
    %17 = vector.broadcast %16 : vector<32x1xf32> to vector<32x256xf32>
    %18 = vector.broadcast %14 : vector<1x256xf32> to vector<32x256xf32>
    %19 = arith.addf %17, %18 : vector<32x256xf32>
    %20 = arith.mulf %1, %19 : vector<32x256xf32>
    %c0_9 = arith.constant 0 : index
    %c0_10 = arith.constant 0 : index
    %c0_11 = arith.constant 0 : index
    %21 = vector.load %arg6[%c0_9, %c0_10, %c0_11] : memref<1x32x256xf32, #tpu.memory_space<vmem>>, vector<1x32x256xf32>
    %22 = vector.shape_cast %21 : vector<1x32x256xf32> to vector<32x256xf32>
    %23 = vector.shape_cast %20 : vector<32x256xf32> to vector<1x32x256xf32>
    tpu.vector_store %arg6[%c0_9, %c0_10, %c0_11], %23 {strides = array<i32>} : memref<1x32x256xf32, #tpu.memory_space<vmem>>, vector<1x32x256xf32>,
    return
  }
  func.func @transform_0(%arg0: i32, %arg1: i32) -> (i32, i32, i32) {
    %c0_i32 = arith.constant 0 : i32
    %c0_i32_0 = arith.constant 0 : i32
    return %arg0, %c0_i32, %arg1 : i32, i32, i32
  }
  func.func @transform_1(%arg0: i32, %arg1: i32) -> (i32, i32, i32) {
    %c0_i32 = arith.constant 0 : i32
    %c0_i32_0 = arith.constant 0 : i32
    %c0_i32_1 = arith.constant 0 : i32
    return %arg0, %c0_i32, %c0_i32_0 : i32, i32, i32
  }
  func.func @transform_2(%arg0: i32, %arg1: i32) -> (i32, i32) {
    %c0_i32 = arith.constant 0 : i32
    %c0_i32_0 = arith.constant 0 : i32
    %c0_i32_1 = arith.constant 0 : i32
    return %c0_i32, %c0_i32_0 : i32, i32
  }
  func.func @transform_3(%arg0: i32, %arg1: i32) -> i32 {
    %c0_i32 = arith.constant 0 : i32
    %c0_i32_0 = arith.constant 0 : i32
    return %c0_i32 : i32
  }
  func.func @transform_4(%arg0: i32, %arg1: i32) -> (i32, i32, i32) {
    %c0_i32 = arith.constant 0 : i32
    %c0_i32_0 = arith.constant 0 : i32
    return %arg0, %c0_i32, %arg1 : i32, i32, i32
  }
}

</mosaic_0001>

<llo_original>
// kernel: tpu_custom_call.1
$region0: #{tpu_custom_call.1}
  #allocation0 [shape = 'u32[]', space=smem, size = 0x4, offset = 0x4, fixed_abs, tag = 'smem constant byte address 0x4 - core index']
  #allocation1 [shape = 'u32[144,128]{1,0:T(1,128)}', space=vmem, size = 0x12000, scoped, tag = 'internal scratch']
  #allocation2 [shape = 'f32[1]{0:T(128)S(6)}', space=smem, size = 0x200, scoped, tag = 'scoped memory for tpu_custom_call.1']
  %s0 = inlined_call_operand.hbm [shape: f32[2,32,256], index: 0, kind: input, shape index: {}]
  %s1 = inlined_call_operand.vmem [shape: f32[2,32,1], index: 1, kind: input, shape index: {}]
  %s2 = inlined_call_operand.vmem [shape: f32[32,1], index: 2, kind: input, shape index: {}]
  %s3 = inlined_call_operand.<no memory space> [shape: f32[1], index: 3, kind: input, shape index: {}]
  %s4 = inlined_call_operand.hbm [shape: f32[2,32,256], index: 4, kind: output, shape index: {}]
  %s5 = sld [smem:[#allocation0]]
  $region53: #{tpu_custom_call.1} parent=0
    _
  %s7 = ssub.s32 1, %s5
  %s8 = scalar_select 0, %s7, %s5
  %9 = sst [smem:[#allocation2]] %s3
  $region1: #{tpu_custom_call.1} parent=0
    #allocation3 [shape = 'u8[65536]{0}', space=vmem, size = 0x10000, scoped, tag = 'input window, operand 0']
    #allocation4 [shape = 's32[2]{0}', space=sflag, size = 0x8, scoped, tag = 'scoped memory for tpu_custom_call.1']
    #allocation5 [shape = 's32[2]{0}', space=sflag, size = 0x8, scoped, tag = 'scoped memory for tpu_custom_call.1']
    #allocation6 [shape = 'u8[65536]{0}', space=vmem, size = 0x10000, scoped, tag = 'output window, operand 0']
    %10 = vsyncpa [#allocation4], 0
    %s11 = scalar_lea.sflag [#allocation4], 1
    %12 = vsyncpa %s11, 0
    %13 = vsyncpa [#allocation5], 0
    %s14 = scalar_lea.sflag [#allocation5], 1
    %15 = vsyncpa %s14, 0
    loop: start=0, step=1, limit=4
    $region2: #{tpu_custom_call.1} parent=1 // loop_pre_header
      _
    $region3: #{tpu_custom_call.1} parent=1 // loop_header
      %s17 = sphi 0, %s21
      %p18 = scmp.ge.s32.totalorder %s17, 4
      %s24 = sphi 0, %s36
      %s25 = sphi 0, %s32
      %s26 = sphi 0, %s24
      %s27 = sphi 0, %s25
      %s28 = sphi 0, %s26
      %s29 = sphi 0, %s27
      %s41 = sphi 0, %s43
      %s44 = sphi 0, %s41
      %s45 = sphi 0, %s44
      %s61 = sphi 0, %s45
      %s67 = sphi 0, %s69
      %s70 = sphi 0, %s67
      %s71 = sphi 0, %s70
      %s87 = sphi 0, %s71
      %s91 = sphi 0, %s91
      %s93 = sphi 0, %s91
      %s94 = sphi 0, %s93
      %s108 = sphi 0, %s94
      %s112 = sphi 0, %s112
      %s114 = sphi 0, %s112
      %s115 = sphi 0, %s114
      %s129 = sphi 0, %s115
      %s137 = sphi 0, %s139
      %s140 = sphi 0, %s137
      %s141 = sphi 0, %s140
      %s157 = sphi 0, %s141
    $region4: #{tpu_custom_call.1} parent=1 // loop_header_branch
      %20 = sbr.rel (%p18) target = $region8
    $region5: #{tpu_custom_call.1} parent=1 // loop_body
      %s22 = ssub.s32 %s17, 1
      %s23 = ssub.s32 %s17, 2
      %s30 = sadd.s32 1, %s25
      %p31 = scmp.ge.s32.totalorder %s30, 1
      %s32 = scalar_select %p31, 0, %s30
      %s33 = sadd.s32 1, %s24
      %s34 = scalar_select %p31, %s33, %s24
      %p35 = scmp.ge.s32.totalorder %s34, 2
      %s36 = scalar_select %p35, 0, %s34
      %s37 = ssub.s32 %s24, %s36
      %s38 = ssub.s32 %s25, %s32
      %s39 = sor.u32 %s37, %s38
      %p40 = scmp.eq.s32.totalorder %s39, 0
      %s42 = sadd.s32 %s41, 1
      %s43 = scalar_select %p40, %s41, %s42
      %p46 = pneg %p40
      %p47 = scmp.eq.s32.totalorder %s17, 1
      %p48 = por %p46, %p47
      %p49 = scmp.ne.s32.totalorder %s41, %s44
      %p50 = scmp.eq.s32.totalorder %s17, 0
      %p51 = por %p49, %p50
      %p52 = scmp.ne.s32.totalorder %s41, %s44
      %p53 = scmp.eq.s32.totalorder %s22, 1
      %p54 = por %p52, %p53
      %p55 = scmp.ne.s32.totalorder %s44, %s45
      %p56 = scmp.eq.s32.totalorder %s22, 0
      %p57 = por %p55, %p56
      %p58 = scmp.ne.s32.totalorder %s44, %s45
      %p59 = scmp.eq.s32.totalorder %s23, 1
      %p60 = por %p58, %p59
      %p62 = scmp.ne.s32.totalorder %s45, %s61
      %p63 = scmp.eq.s32.totalorder %s23, 0
      %p64 = por %p62, %p63
      %s65 = ssub.s32 %s24, %s36
      %p66 = scmp.eq.s32.totalorder %s65, 0
      %s68 = sadd.s32 %s67, 1
      %s69 = scalar_select %p66, %s67, %s68
      %p72 = pneg %p66
      %p73 = scmp.eq.s32.totalorder %s17, 1
      %p74 = por %p72, %p73
      %p75 = scmp.ne.s32.totalorder %s67, %s70
      %p76 = scmp.eq.s32.totalorder %s17, 0
      %p77 = por %p75, %p76
      %p78 = scmp.ne.s32.totalorder %s67, %s70
      %p79 = scmp.eq.s32.totalorder %s22, 1
      %p80 = por %p78, %p79
      %p81 = scmp.ne.s32.totalorder %s70, %s71
      %p82 = scmp.eq.s32.totalorder %s22, 0
      %p83 = por %p81, %p82
      %p84 = scmp.ne.s32.totalorder %s70, %s71
      %p85 = scmp.eq.s32.totalorder %s23, 1
      %p86 = por %p84, %p85
      %p88 = scmp.ne.s32.totalorder %s71, %s87
      %p89 = scmp.eq.s32.totalorder %s23, 0
      %p90 = por %p88, %p89
      %s92 = sadd.s32 %s91, 1
      %p95 = scmp.eq.s32.totalorder %s17, 1
      %p96 = scmp.ne.s32.totalorder %s91, %s93
      %p97 = scmp.eq.s32.totalorder %s17, 0
      %p98 = por %p96, %p97
      %p99 = scmp.ne.s32.totalorder %s91, %s93
      %p100 = scmp.eq.s32.totalorder %s22, 1
      %p101 = por %p99, %p100
      %p102 = scmp.ne.s32.totalorder %s93, %s94
      %p103 = scmp.eq.s32.totalorder %s22, 0
      %p104 = por %p102, %p103
      %p105 = scmp.ne.s32.totalorder %s93, %s94
      %p106 = scmp.eq.s32.totalorder %s23, 1
      %p107 = por %p105, %p106
      %p109 = scmp.ne.s32.totalorder %s94, %s108
      %p110 = scmp.eq.s32.totalorder %s23, 0
      %p111 = por %p109, %p110
      %s113 = sadd.s32 %s112, 1
      %p116 = scmp.eq.s32.totalorder %s17, 1
      %p117 = scmp.ne.s32.totalorder %s112, %s114
      %p118 = scmp.eq.s32.totalorder %s17, 0
      %p119 = por %p117, %p118
      %p120 = scmp.ne.s32.totalorder %s112, %s114
      %p121 = scmp.eq.s32.totalorder %s22, 1
      %p122 = por %p120, %p121
      %p123 = scmp.ne.s32.totalorder %s114, %s115
      %p124 = scmp.eq.s32.totalorder %s22, 0
      %p125 = por %p123, %p124
      %p126 = scmp.ne.s32.totalorder %s114, %s115
      %p127 = scmp.eq.s32.totalorder %s23, 1
      %p128 = por %p126, %p127
      %p130 = scmp.ne.s32.totalorder %s115, %s129
      %p131 = scmp.eq.s32.totalorder %s23, 0
      %p132 = por %p130, %p131
      %s133 = ssub.s32 %s24, %s36
      %s134 = ssub.s32 %s25, %s32
      %s135 = sor.u32 %s133, %s134
      %p136 = scmp.eq.s32.totalorder %s135, 0
      %s138 = sadd.s32 %s137, 1
      %s139 = scalar_select %p136, %s137, %s138
      %p142 = pneg %p136
      %p143 = scmp.eq.s32.totalorder %s17, 1
      %p144 = por %p142, %p143
      %p145 = scmp.ne.s32.totalorder %s137, %s140
      %p146 = scmp.eq.s32.totalorder %s17, 0
      %p147 = por %p145, %p146
      %p148 = scmp.ne.s32.totalorder %s137, %s140
      %p149 = scmp.eq.s32.totalorder %s22, 1
      %p150 = por %p148, %p149
      %p151 = scmp.ne.s32.totalorder %s140, %s141
      %p152 = scmp.eq.s32.totalorder %s22, 0
      %p153 = por %p151, %p152
      %p154 = scmp.ne.s32.totalorder %s140, %s141
      %p155 = scmp.eq.s32.totalorder %s23, 1
      %p156 = por %p154, %p155
      %p158 = scmp.ne.s32.totalorder %s141, %s157
      %p159 = scmp.eq.s32.totalorder %s23, 0
      %p160 = por %p158, %p159
      %p161 = scmp.le.s32.totalorder 1, %s17
      %p162 = scmp.lt.s32.totalorder %s17, 3
      %p163 = pnand %p161, %p162
      %p164 = pneg %p163
      // Predicated region
      $region9: #{tpu_custom_call.1} parent=5 // pred_check
        _
      $region10: #{tpu_custom_call.1} parent=5 // pred_check_branch
        %166 = sbr.rel (%p163) target = $region12
      $region11: #{tpu_custom_call.1} parent=5 // pred_region
        %s167 = ssub.s32 %s17, 1
        // Predicated region
        $region13: #{tpu_custom_call.1} parent=11 // pred_check
          %p168 = pneg %p104
        $region14: #{tpu_custom_call.1} parent=11 // pred_check_branch
          %170 = sbr.rel (%p168) target = $region16
        $region15: #{tpu_custom_call.1} parent=11 // pred_region
          _
        $region16: #{tpu_custom_call.1} parent=11 // pred_fallthru
          _
        // Predicated region
        $region17: #{tpu_custom_call.1} parent=11 // pred_check
          %p171 = pneg %p125
        $region18: #{tpu_custom_call.1} parent=11 // pred_check_branch
          %173 = sbr.rel (%p171) target = $region20
        $region19: #{tpu_custom_call.1} parent=11 // pred_region
          _
        $region20: #{tpu_custom_call.1} parent=11 // pred_fallthru
          _
      $region12: #{tpu_custom_call.1} parent=5 // pred_fallthru
        _
      %p174 = scmp.lt.s32.totalorder %s17, 2
      // Predicated region
      $region21: #{tpu_custom_call.1} parent=5 // pred_check
        %p175 = pneg %p174
      $region22: #{tpu_custom_call.1} parent=5 // pred_check_branch
        %177 = sbr.rel (%p175) target = $region24
      $region23: #{tpu_custom_call.1} parent=5 // pred_region
        // Predicated region
        $region25: #{tpu_custom_call.1} parent=23 // pred_check
          %p178 = pneg %p51
        $region26: #{tpu_custom_call.1} parent=23 // pred_check_branch
          %180 = sbr.rel (%p178) target = $region28
        $region27: #{tpu_custom_call.1} parent=23 // pred_region
          %s181 = sand.u32 %s41, 1
          %s182 = scalar_lea.sflag [#allocation4], %s181
          %s183 = sand.u32 %s41, 1
          %s184 = smul.addr %s183, 64
          %s185 = scalar_lea.vmem [#allocation3], %s184
          %s186 = smul.u32 2, %s25
          %s188 = ssub.s32 1024, 1024
          %189 = vsyncadd %s182, %s188
          %s190 = smul.addr %s24, 8
          %s191 = sadd.s32 %s186, %s190
          %s192 = smul.addr %s191, 128
          %s193 = scalar_lea.hbm %s0, %s192
          %s194 = sshll.u32 %s185, 4
          %s195 = int_to_ptr.vmem [resolvable:$true] %s194
          %200 = dma.hbm_to_vmem [thread:$0]  %s193, 1024, %s195, %s182, 256, 256, 16
        $region28: #{tpu_custom_call.1} parent=23 // pred_fallthru
          _
        // Predicated region
        $region29: #{tpu_custom_call.1} parent=23 // pred_check
          %p201 = pneg %p77
        $region30: #{tpu_custom_call.1} parent=23 // pred_check_branch
          %203 = sbr.rel (%p201) target = $region32
        $region31: #{tpu_custom_call.1} parent=23 // pred_region
          %p204 = scmp.lt.s32.totalorder %s24, 1
          %s205 = scalar_select %p204, %s24, 1
          %s206 = smul.addr %s205, 4
          %s207 = smul.addr %s206, 8
          %s208 = scalar_lea.vmem %s1, %s207
        $region32: #{tpu_custom_call.1} parent=23 // pred_fallthru
          _
      $region24: #{tpu_custom_call.1} parent=5 // pred_fallthru
        _
      %p209 = scmp.le.s32.totalorder 1, %s17
      %p210 = scmp.lt.s32.totalorder %s17, 3
      %p211 = pnand %p209, %p210
      %p212 = pneg %p211
      // Predicated region
      $region33: #{tpu_custom_call.1} parent=5 // pred_check
        _
      $region34: #{tpu_custom_call.1} parent=5 // pred_check_branch
        %214 = sbr.rel (%p211) target = $region36
      $region35: #{tpu_custom_call.1} parent=5 // pred_region
        %s215 = ssub.s32 %s17, 1
        %s216 = sand.u32 %s44, 1
        %s217 = scalar_lea.sflag [#allocation4], %s216
        %s218 = sand.u32 %s44, 1
        %s219 = smul.addr %s218, 64
        %s220 = scalar_lea.vmem [#allocation3], %s219
        // Predicated region
        $region37: #{tpu_custom_call.1} parent=35 // pred_check
          %p221 = pneg %p57
        $region38: #{tpu_custom_call.1} parent=35 // pred_check_branch
          %223 = sbr.rel (%p221) target = $region40
        $region39: #{tpu_custom_call.1} parent=35 // pred_region
          %224 = dma.done %s217, 1024
        $region40: #{tpu_custom_call.1} parent=35 // pred_fallthru
          _
        %s225 = sand.u32 %s44, 1
        %s226 = scalar_lea.sflag [#allocation4], %s225
        %s227 = sand.u32 %s44, 1
        %s228 = smul.addr %s227, 64
        %s229 = scalar_lea.vmem [#allocation3], %s228
        %p230 = pneg %p57
        %p231 = pneg %p54
        %p232 = scmp.lt.s32.totalorder %s26, 1
        %s233 = scalar_select %p232, %s26, 1
        %s234 = smul.addr %s233, 4
        %s235 = smul.addr %s234, 8
        %s236 = scalar_lea.vmem %s1, %s235
        %p237 = pneg %p83
        %p238 = pneg %p80
        %p239 = pneg %p104
        %p240 = pneg %p101
        %p241 = pneg %p125
        %p242 = pneg %p122
        %p243 = pneg %p153
        %p244 = pneg %p150
        %s245 = sand.u32 %s140, 1
        %s246 = scalar_lea.sflag [#allocation5], %s245
        %s247 = sand.u32 %s140, 1
        %s248 = smul.addr %s247, 64
        %s249 = scalar_lea.vmem [#allocation6], %s248
        %s250 = smul.u32 2, %s27
        %p251 = scmp.lt.s32.totalorder %s26, 1
        %s252 = scalar_select %p251, %s26, 1
        %s253 = smul.addr %s252, 4
        %s254 = smul.addr %s253, 8
        %s255 = scalar_lea.vmem %s1, %s254
        %s256 = smul.u32 2, %s27
        %v257 = vld [vmem:[%s220] sm:$0xff]
        %v258 = vld [vmem:[%s220 + $0x8] sm:$0xff]
        %v259 = vld [vmem:[%s220 + $0x10] sm:$0xff]
        %v260 = vld [vmem:[%s220 + $0x18] sm:$0xff]
        %v261 = vld [vmem:[%s220 + $0x20] sm:$0xff]
        %v262 = vld [vmem:[%s220 + $0x28] sm:$0xff]
        %v263 = vld [vmem:[%s220 + $0x30] sm:$0xff]
        %v264 = vld [vmem:[%s220 + $0x38] sm:$0xff]
        %v265 = vld [vmem:[%s2] sm:$0xff]
        %v266 = vld [vmem:[%s2 + $0x8] sm:$0xff]
        %v267 = vld [vmem:[%s2 + $0x10] sm:$0xff]
        %v268 = vld [vmem:[%s2 + $0x18] sm:$0xff]
        %270 = vset.pattern.permute.xlu0 0
        %271 = vperm.xlu0 %270, %v265
        %v272 = vpop.permute.xlu0 %271
        %275 = vset.pattern.permute.xlu0 0
        %276 = vperm.xlu0 %275, %v266
        %v277 = vpop.permute.xlu0 %276
        %280 = vset.pattern.permute.xlu0 0
        %281 = vperm.xlu0 %280, %v267
        %v282 = vpop.permute.xlu0 %281
        %285 = vset.pattern.permute.xlu0 0
        %286 = vperm.xlu0 %285, %v268
        %v287 = vpop.permute.xlu0 %286
        %v289 = vmul.f32 %v257, %v272
        %v290 = vmul.f32 %v258, %v272
        %v291 = vmul.f32 %v259, %v277
        %v292 = vmul.f32 %v260, %v277
        %v293 = vmul.f32 %v261, %v282
        %v294 = vmul.f32 %v262, %v282
        %v295 = vmul.f32 %v263, %v287
        %v296 = vmul.f32 %v264, %v287
        %v297 = vadd.f32 %v289, %v291
        %v298 = vadd.f32 %v297, %v293
        %v299 = vadd.f32 %v298, %v295
        %v300 = vrot.slane %v299, 4
        %v301 = vadd.f32 %v299, %v300
        %v302 = vrot.slane %v301, 2
        %v303 = vadd.f32 %v301, %v302
        %v304 = vrot.slane %v303, 1
        %v305 = vadd.f32 %v303, %v304
        %v306 = vadd.f32 %v290, %v292
        %v307 = vadd.f32 %v306, %v294
        %v308 = vadd.f32 %v307, %v296
        %v309 = vrot.slane %v308, 4
        %v310 = vadd.f32 %v308, %v309
        %v311 = vrot.slane %v310, 2
        %v312 = vadd.f32 %v310, %v311
        %v313 = vrot.slane %v312, 1
        %v314 = vadd.f32 %v312, %v313
        %s315 = sld [smem:[#allocation2]]
        %v316 = vstv %s315
        %v317 = vadd.f32 %v305, %v316
        %v318 = vadd.f32 %v314, %v316
        %v319 = vxor.u32 %v317, 2147483648
        %v320 = vxor.u32 %v318, 2147483648
        %v321 = vmul.f32 %v319, 1.442695
        %v322 = vpow.pop %v321
        %v323 = vmul.f32 %v320, 1.442695
        %v324 = vpow.pop %v323
        %v325 = vadd.f32 %v322, 1.0
        %v326 = vadd.f32 %v324, 1.0
        %v327 = vrcp.pop %v325
        %v328 = vmul.f32 1.0, %v327
        %v329 = vrcp.pop %v326
        %v330 = vmul.f32 1.0, %v329
        %v331 = vld [vmem:[%s255] sm:$0xff]
        %v332 = vld [vmem:[%s255 + $0x8] sm:$0xff]
        %v333 = vld [vmem:[%s255 + $0x10] sm:$0xff]
        %v334 = vld [vmem:[%s255 + $0x18] sm:$0xff]
        %336 = vset.pattern.permute.xlu0 0
        %337 = vperm.xlu0 %336, %v331
        %v338 = vpop.permute.xlu0 %337
        %341 = vset.pattern.permute.xlu0 0
        %342 = vperm.xlu0 %341, %v332
        %v343 = vpop.permute.xlu0 %342
        %346 = vset.pattern.permute.xlu0 0
        %347 = vperm.xlu0 %346, %v333
        %v348 = vpop.permute.xlu0 %347
        %351 = vset.pattern.permute.xlu0 0
        %352 = vperm.xlu0 %351, %v334
        %v353 = vpop.permute.xlu0 %352
        %v355 = vadd.f32 %v338, %v328
        %v356 = vadd.f32 %v338, %v330
        %v357 = vadd.f32 %v343, %v328
        %v358 = vadd.f32 %v343, %v330
        %v359 = vadd.f32 %v348, %v328
        %v360 = vadd.f32 %v348, %v330
        %v361 = vadd.f32 %v353, %v328
        %v362 = vadd.f32 %v353, %v330
        %v363 = vmul.f32 %v257, %v355
        %v364 = vmul.f32 %v258, %v356
        %v365 = vmul.f32 %v259, %v357
        %v366 = vmul.f32 %v260, %v358
        %v367 = vmul.f32 %v261, %v359
        %v368 = vmul.f32 %v262, %v360
        %v369 = vmul.f32 %v263, %v361
        %v370 = vmul.f32 %v264, %v362
        %371 = vst [vmem:[%s249] sm:$0xff] %v363
        %372 = vst [vmem:[%s249 + $0x8] sm:$0xff] %v364
        %373 = vst [vmem:[%s249 + $0x10] sm:$0xff] %v365
        %374 = vst [vmem:[%s249 + $0x18] sm:$0xff] %v366
        %375 = vst [vmem:[%s249 + $0x20] sm:$0xff] %v367
        %376 = vst [vmem:[%s249 + $0x28] sm:$0xff] %v368
        %377 = vst [vmem:[%s249 + $0x30] sm:$0xff] %v369
        %378 = vst [vmem:[%s249 + $0x38] sm:$0xff] %v370
        %s379 = sand.u32 %s140, 1
        %s380 = scalar_lea.sflag [#allocation5], %s379
        %s381 = sand.u32 %s140, 1
        %s382 = smul.addr %s381, 64
        %s383 = scalar_lea.vmem [#allocation6], %s382
        // Predicated region
        $region41: #{tpu_custom_call.1} parent=35 // pred_check
          %p384 = pneg %p150
        $region42: #{tpu_custom_call.1} parent=35 // pred_check_branch
          %386 = sbr.rel (%p384) target = $region44
        $region43: #{tpu_custom_call.1} parent=35 // pred_region
          %s387 = smul.u32 2, %s27
          %s389 = ssub.s32 1024, 1024
          %390 = vsyncadd %s380, %s389
          %s391 = smul.addr %s26, 8
          %s392 = sadd.s32 %s387, %s391
          %s393 = smul.addr %s392, 128
          %s394 = scalar_lea.hbm %s4, %s393
          %s395 = sshll.u32 %s383, 4
          %s396 = int_to_ptr.vmem [resolvable:$true] %s395
          %401 = dma.vmem_to_hbm [thread:$0]  %s396, 1024, %s394, %s380, 256, 256, 16
        $region44: #{tpu_custom_call.1} parent=35 // pred_fallthru
          _
      $region36: #{tpu_custom_call.1} parent=5 // pred_fallthru
        _
      %p402 = scmp.le.s32.totalorder 2, %s17
      // Predicated region
      $region45: #{tpu_custom_call.1} parent=5 // pred_check
        %p403 = pneg %p402
      $region46: #{tpu_custom_call.1} parent=5 // pred_check_branch
        %405 = sbr.rel (%p403) target = $region48
      $region47: #{tpu_custom_call.1} parent=5 // pred_region
        %s406 = ssub.s32 %s17, 2
        // Predicated region
        $region49: #{tpu_custom_call.1} parent=47 // pred_check
          %p407 = pneg %p156
        $region50: #{tpu_custom_call.1} parent=47 // pred_check_branch
          %409 = sbr.rel (%p407) target = $region52
        $region51: #{tpu_custom_call.1} parent=47 // pred_region
          %s410 = sand.u32 %s141, 1
          %s411 = scalar_lea.sflag [#allocation5], %s410
          %s412 = sand.u32 %s141, 1
          %s413 = smul.addr %s412, 64
          %s414 = scalar_lea.vmem [#allocation6], %s413
          %415 = dma.done %s411, 1024
        $region52: #{tpu_custom_call.1} parent=47 // pred_fallthru
          _
      $region48: #{tpu_custom_call.1} parent=5 // pred_fallthru
        _
    $region6: #{tpu_custom_call.1} parent=1 // loop_footer
      %s21 = sadd.s32 1, %s17
    $region7: #{tpu_custom_call.1} parent=1 // loop_footer_branch
      %16 = sbr.rel target = $region3
    $region8: #{tpu_custom_call.1} parent=1 // loop_exit
      _
    %416 = vsyncpa [#allocation4], 1
    %s417 = scalar_lea.sflag [#allocation4], 1
    %418 = vsyncpa %s417, 1
    %419 = vsyncpa [#allocation5], 1
    %s420 = scalar_lea.sflag [#allocation5], 1
    %421 = vsyncpa %s420, 1

</llo_original>
